<compile_context>
chip_gen: v7x
topology: tpu7x:2x2x1
jax: 0.10.0
libtpu: 0.0.40
codegen_flags: <defaults>
</compile_context>

<pallas_src>
import functools

import jax
import jax.numpy as jnp
from jax.experimental import pallas as pl
from jax.experimental.pallas import tpu as pltpu


def _composed_loss_kernel(slab_ref, pmean_ref, out_ref, *, n_base, n_rrs, n_nan):
    # slab columns: [chla(1) | kd | bbp | rrs || chla_p | kd_p | bbp_p | rrs_p || nan]
    slab = slab_ref[...]
    n_pred = n_base + n_rrs

    d = slab[:, 0:n_pred] - slab[:, n_pred:2 * n_pred]
    sq = d * d

    # (chla)^2 + sum(kd^2) + sum(bbp^2)  -> first n_base columns, weight 1
    core = jnp.sum(sq[:, 0:n_base], axis=1, keepdims=True)
    # mean(rrs^2) = sum / n_rrs  (exact division, same ordering as reference)
    rrs = jnp.sum(sq[:, n_base:n_pred], axis=1, keepdims=True) / jnp.float32(n_rrs)
    custom_array = core + rrs  # (B, 1)

    # Number of non-NaN entries per row (exact, no select/broadcast).
    nan_part = slab[:, 2 * n_pred:2 * n_pred + n_nan]
    lens = jnp.sum((~jnp.isnan(nan_part)).astype(jnp.float32),
                   axis=1, keepdims=True)  # (B, 1)

    means_output = custom_array / lens  # exact division (feeds 1e-5 check)

    loss = jnp.mean(means_output) + jnp.float32(0.001) * pmean_ref[0, 0]
    out_ref[0, 0] = loss.astype(jnp.float32)


def composed_loss_function(chla, chla_pred, kd_, kd_pred, bbp_, bbp_pred,
                           rrs_, rrs_pred, nan_array, param):
    """Pallas TPU implementation of composed_loss_function.forward.

    chla / chla_pred : (B,)      rrs_ / rrs_pred : (B, 5)
    kd_ / kd_pred    : (B, 5)    bbp_ / bbp_pred : (B, 3)
    nan_array        : (B, N)    param           : any array
    Returns a float32 scalar.
    """
    chla2 = chla.reshape(-1, 1)
    chla_pred2 = chla_pred.reshape(-1, 1)

    n_base = 1 + kd_.shape[1] + bbp_.shape[1]   # chla + kd + bbp columns
    n_rrs = rrs_.shape[1]
    n_nan = nan_array.shape[1]

    # Single wrapper concat -> one tensor input / one DMA.
    slab = jnp.concatenate(
        [chla2, kd_, bbp_, rrs_,
         chla_pred2, kd_pred, bbp_pred, rrs_pred,
         nan_array], axis=1).astype(jnp.float32)

    # Fold param's contribution as a precomputed (1,1) SMEM scalar.
    param_mean = jnp.mean(param.astype(jnp.float32)).reshape(1, 1)

    kernel = functools.partial(_composed_loss_kernel,
                               n_base=n_base, n_rrs=n_rrs, n_nan=n_nan)

    out = pl.pallas_call(
        kernel,
        out_shape=jax.ShapeDtypeStruct((1, 1), jnp.float32),
        in_specs=[pl.BlockSpec(memory_space=pltpu.MemorySpace.VMEM),
                  pl.BlockSpec(memory_space=pltpu.MemorySpace.SMEM)],
        out_specs=pl.BlockSpec(memory_space=pltpu.MemorySpace.SMEM),
    )(slab, param_mean)
    return out[0, 0]


def _reference(chla, chla_pred, kd_, kd_pred, bbp_, bbp_pred,
               rrs_, rrs_pred, nan_array, param):
    custom_array = (((rrs_ - rrs_pred) ** 2).mean(axis=1)
                    + (chla - chla_pred) ** 2
                    + ((kd_ - kd_pred) ** 2).sum(axis=1)
                    + ((bbp_ - bbp_pred) ** 2).sum(axis=1))
    lens = jnp.sum(~jnp.isnan(nan_array), axis=1)
    means_output = custom_array / lens
    return means_output.mean().astype(jnp.float32) + 0.001 * param.mean()


if __name__ == "__main__":
    key = jax.random.PRNGKey(0)
    B = 8                      # batch of samples
    ks = jax.random.split(key, 12)

    chla = jax.random.normal(ks[0], (B,), jnp.float32)
    chla_pred = jax.random.normal(ks[1], (B,), jnp.float32)
    kd_ = jax.random.normal(ks[2], (B, 5), jnp.float32)
    kd_pred = jax.random.normal(ks[3], (B, 5), jnp.float32)
    bbp_ = jax.random.normal(ks[4], (B, 3), jnp.float32)
    bbp_pred = jax.random.normal(ks[5], (B, 3), jnp.float32)
    rrs_ = jax.random.normal(ks[6], (B, 5), jnp.float32)
    rrs_pred = jax.random.normal(ks[7], (B, 5), jnp.float32)

    # nan_array: (B, 9) with a deterministic NaN pattern (every row keeps
    # at least one finite entry so lens > 0).
    nan_array = jax.random.normal(ks[8], (B, 9), jnp.float32)
    nan_mask = jax.random.bernoulli(ks[9], 0.3, (B, 9))
    nan_mask = nan_mask.at[:, 0].set(False)
    nan_array = jnp.where(nan_mask, jnp.nan, nan_array)

    param = jax.random.normal(ks[10], (8, 8), jnp.float32)

    loss = composed_loss_function(chla, chla_pred, kd_, kd_pred,
                                  bbp_, bbp_pred, rrs_, rrs_pred,
                                  nan_array, param)
    loss = jax.block_until_ready(loss)

    ref = _reference(chla, chla_pred, kd_, kd_pred, bbp_, bbp_pred,
                     rrs_, rrs_pred, nan_array, param)
    assert jnp.allclose(loss, ref, rtol=1e-5, atol=1e-5), (loss, ref)
    print("KERNEL_OK")
</pallas_src>

<mosaic_0001>
module attributes {stable_mosaic.version = 11 : i64} {
  func.func @_composed_loss_kernel(%arg0: memref<8x37xf32, #tpu.memory_space<vmem>>, %arg1: memref<1x1xf32, #tpu.memory_space<smem>>, %arg2: memref<1x1xf32, #tpu.memory_space<smem>>) attributes {dimension_semantics = [], scalar_prefetch = 0 : i64, scratch_operands = 0 : i64, tpu.core_type = #tpu.core_type<tc>} {
    %c0 = arith.constant 0 : index
    %c0_0 = arith.constant 0 : index
    %0 = vector.load %arg0[%c0, %c0_0] : memref<8x37xf32, #tpu.memory_space<vmem>>, vector<8x37xf32>
    %1 = vector.extract_strided_slice %0 {offsets = [0, 0], sizes = [8, 14], strides = [1, 1]} : vector<8x37xf32> to vector<8x14xf32>
    %2 = vector.extract_strided_slice %0 {offsets = [0, 14], sizes = [8, 14], strides = [1, 1]} : vector<8x37xf32> to vector<8x14xf32>
    %3 = arith.subf %1, %2 : vector<8x14xf32>
    %4 = arith.mulf %3, %3 : vector<8x14xf32>
    %5 = vector.extract_strided_slice %4 {offsets = [0, 0], sizes = [8, 9], strides = [1, 1]} : vector<8x14xf32> to vector<8x9xf32>
    %cst = arith.constant dense<0.000000e+00> : vector<8xf32>
    %6 = vector.multi_reduction <add>, %5, %cst [1] : vector<8x9xf32> to vector<8xf32>
    %7 = vector.shape_cast %6 : vector<8xf32> to vector<8x1xf32>
    %8 = vector.extract_strided_slice %4 {offsets = [0, 9], sizes = [8, 5], strides = [1, 1]} : vector<8x14xf32> to vector<8x5xf32>
    %cst_1 = arith.constant dense<0.000000e+00> : vector<8xf32>
    %9 = vector.multi_reduction <add>, %8, %cst_1 [1] : vector<8x5xf32> to vector<8xf32>
    %10 = vector.shape_cast %9 : vector<8xf32> to vector<8x1xf32>
    %cst_2 = arith.constant 5.000000e+00 : f32
    %11 = vector.broadcast %cst_2 : f32 to vector<8x1xf32>
    %12 = arith.divf %10, %11 : vector<8x1xf32>
    %13 = arith.addf %7, %12 : vector<8x1xf32>
    %14 = vector.extract_strided_slice %0 {offsets = [0, 28], sizes = [8, 9], strides = [1, 1]} : vector<8x37xf32> to vector<8x9xf32>
    %15 = arith.cmpf one, %14, %14 : vector<8x9xf32>
    %cst_3 = arith.constant dense<true> : vector<8x9xi1>
    %16 = arith.xori %15, %cst_3 : vector<8x9xi1>
    %17 = arith.extui %16 : vector<8x9xi1> to vector<8x9xi32>
    %18 = arith.sitofp %17 : vector<8x9xi32> to vector<8x9xf32>
    %cst_4 = arith.constant dense<0.000000e+00> : vector<8xf32>
    %19 = vector.multi_reduction <add>, %18, %cst_4 [1] : vector<8x9xf32> to vector<8xf32>
    %20 = vector.shape_cast %19 : vector<8xf32> to vector<8x1xf32>
    %21 = arith.divf %13, %20 : vector<8x1xf32>
    %22 = vector.shape_cast %21 : vector<8x1xf32> to vector<1x8x1xf32>
    %cst_5 = arith.constant dense<0.000000e+00> : vector<1xf32>
    %23 = vector.multi_reduction <add>, %22, %cst_5 [1, 2] : vector<1x8x1xf32> to vector<1xf32>
    %24 = vector.shape_cast %23 : vector<1xf32> to vector<1x1x1xf32>
    %25 = vector.extract %24[0, 0, 0] : f32 from vector<1x1x1xf32>
    %cst_6 = arith.constant 8.000000e+00 : f32
    %26 = arith.divf %25, %cst_6 : f32
    %c0_7 = arith.constant 0 : index
    %c0_8 = arith.constant 0 : index
    %27 = memref.load %arg1[%c0_7, %c0_8] : memref<1x1xf32, #tpu.memory_space<smem>>
    %cst_9 = arith.constant 1.000000e-03 : f32
    %28 = arith.mulf %cst_9, %27 : f32
    %29 = arith.addf %26, %28 : f32
    %c0_10 = arith.constant 0 : index
    %c0_11 = arith.constant 0 : index
    %30 = memref.load %arg2[%c0_10, %c0_11] : memref<1x1xf32, #tpu.memory_space<smem>>
    memref.store %29, %arg2[%c0_10, %c0_11] : memref<1x1xf32, #tpu.memory_space<smem>>
    return
  }
}

</mosaic_0001>

<llo_original>
// kernel: tpu_custom_call.1
$region0: #{tpu_custom_call.1}
  #allocation0 [shape = 'u32[]', space=smem, size = 0x4, offset = 0x4, fixed_abs, tag = 'smem constant byte address 0x4 - core index']
  #allocation1 [shape = 'u32[144,128]{1,0:T(1,128)}', space=vmem, size = 0x12000, scoped, tag = 'internal scratch']
  #allocation2 [shape = 'f32[1,1]{1,0:T(1,128)S(6)}', space=smem, size = 0x200, scoped, tag = 'scoped memory for tpu_custom_call.1']
  %s0 = inlined_call_operand.hbm [shape: f32[8,37], index: 0, kind: input, shape index: {}]
  %s1 = inlined_call_operand.<no memory space> [shape: f32[1,1], index: 1, kind: input, shape index: {}]
  %s2 = inlined_call_operand.hbm [shape: f32[1,1], index: 2, kind: output, shape index: {}]
  %s3 = sld [smem:[#allocation0]]
  $region22: #{tpu_custom_call.1} parent=0
    _
  %s5 = ssub.s32 1, %s3
  %s6 = scalar_select 0, %s5, %s3
  %7 = sst [smem:[#allocation2]] %s1
  $region1: #{tpu_custom_call.1} parent=0
    #allocation3 [shape = 'u8[4096]{0}', space=vmem, size = 0x1000, scoped, tag = 'input window, operand 0, single buffered']
    #allocation4 [shape = 's32[1]{0}', space=sflag, size = 0x4, scoped, tag = 'scoped memory for tpu_custom_call.1']
    #allocation5 [shape = 's32[1]{0}', space=sflag, size = 0x4, scoped, tag = 'scoped memory for tpu_custom_call.1']
    #allocation6 [shape = 'u8[512]{0}', space=smem, size = 0x200, scoped, tag = 'output window, operand 0, single buffered']
    %8 = vsyncpa [#allocation4], 0
    %9 = vsyncpa [#allocation5], 0
    // Predicated region
    $region2: #{tpu_custom_call.1} parent=1 // pred_check
      _
    $region3: #{tpu_custom_call.1} parent=1 // pred_check_branch
      %11 = sbr.rel (0) target = $region5
    $region4: #{tpu_custom_call.1} parent=1 // pred_region
      %s13 = ssub.s32 128, 128
      %14 = vsyncadd [#allocation4], %s13
      %s16 = sshll.u32 [#allocation3], 4
      %s17 = int_to_ptr.vmem [resolvable:$true] %s16
      %19 = dma.hbm_to_vmem [thread:$0]  %s0, 128, %s17, [#allocation4]
    $region5: #{tpu_custom_call.1} parent=1 // pred_fallthru
      _
    // Predicated region
    $region6: #{tpu_custom_call.1} parent=1 // pred_check
      _
    $region7: #{tpu_custom_call.1} parent=1 // pred_check_branch
      %21 = sbr.rel (0) target = $region9
    $region8: #{tpu_custom_call.1} parent=1 // pred_region
      _
    $region9: #{tpu_custom_call.1} parent=1 // pred_fallthru
      _
    // Predicated region
    $region10: #{tpu_custom_call.1} parent=1 // pred_check
      _
    $region11: #{tpu_custom_call.1} parent=1 // pred_check_branch
      %23 = sbr.rel (0) target = $region13
    $region12: #{tpu_custom_call.1} parent=1 // pred_region
      %24 = dma.done [#allocation4], 128
    $region13: #{tpu_custom_call.1} parent=1 // pred_fallthru
      _
    %v25 = vld [vmem:[#allocation3] sm:$0xff]
    %27 = vrot.lane.b32.xlu0 %v25, 114
    %v28 = vpop.permute.xlu0 %27
    %v30 = vsub.f32 %v25, %v28
    %v31 = vmul.f32 %v30, %v30
    %vm32 = vcmask 72704
    %v33 = vsel %vm32, %v31, 0.0
    %34 = vadd.xlane.f32.xlu0 %v33
    %v35 = vpop.xlane.xlu0 %34
    %37 = vrot.lane.b32.xlu0 %v31, 119
    %v38 = vpop.permute.xlu0 %37
    %vm40 = vcmask 39936
    %v41 = vsel %vm40, %v38, 0.0
    %42 = vadd.xlane.f32.xlu0 %v41
    %v43 = vpop.xlane.xlu0 %42
    %v44 = vrcp.pop 5.0
    %v45 = vmul.f32 %v43, %v44
    %v46 = vadd.f32 %v35, %v45
    %vm47 = vcmp.ne.f32.partialorder %v25, %v25
    %vm48 = vmxor %vm47, 1
    %v49 = vsel %vm48, 1, 0
    %v50 = vcvt.s32.f32 %v49
    %52 = vrot.lane.b32.xlu0 %v50, 100
    %v53 = vpop.permute.xlu0 %52
    %v55 = vsel %vm32, %v53, 0.0
    %56 = vadd.xlane.f32.xlu0 %v55
    %v57 = vpop.xlane.xlu0 %56
    %v58 = vrcp.pop %v57
    %v59 = vmul.f32 %v46, %v58
    %vm60 = vcmask 7168
    %v61 = vsel %vm60, %v59, 0.0
    %62 = vadd.xlane.f32.xlu0 %v61
    %v63 = vpop.xlane.xlu0 %62
    %v64 = vrot.slane %v63, 4
    %v65 = vadd.f32 %v63, %v64
    %v66 = vrot.slane %v65, 2
    %v67 = vadd.f32 %v65, %v66
    %v68 = vrot.slane %v67, 1
    %v69 = vadd.f32 %v67, %v68
    %s70 = vtos %v69
    %v71 = vrcp.pop 8.0
    %s72 = vtos %v71
    %s73 = smul.f32 %s70, %s72
    %s74 = sld [smem:[#allocation2]]
    %s75 = smul.f32 %s74, 0.001
    %s76 = sadd.f32 %s73, %s75
    %s77 = scalar_lea.smem [#allocation6], 0
    %78 = sst [smem:[%s77]] %s76
    // Predicated region
    $region14: #{tpu_custom_call.1} parent=1 // pred_check
      _
    $region15: #{tpu_custom_call.1} parent=1 // pred_check_branch
      %80 = sbr.rel (0) target = $region17
    $region16: #{tpu_custom_call.1} parent=1 // pred_region
      %s82 = ssub.s32 16, 16
      %83 = vsyncadd [#allocation5], %s82
      %86 = dma.smem_to_hbm [#allocation6], 16, %s2, [#allocation5]
    $region17: #{tpu_custom_call.1} parent=1 // pred_fallthru
      _
    // Predicated region
    $region18: #{tpu_custom_call.1} parent=1 // pred_check
      _
    $region19: #{tpu_custom_call.1} parent=1 // pred_check_branch
      %88 = sbr.rel (0) target = $region21
    $region20: #{tpu_custom_call.1} parent=1 // pred_region
      %89 = dma.done [#allocation5], 16
    $region21: #{tpu_custom_call.1} parent=1 // pred_fallthru
      _
    %90 = sfence
    %91 = vsyncpa [#allocation4], 1
    %92 = vsyncpa [#allocation5], 1

</llo_original>
